<compile_context>
chip_gen: v6e
topology: v6e:2x2x1
jax: 0.10.0
libtpu: 0.0.40
codegen_flags: <defaults>
</compile_context>

<pallas_src>
import functools

import jax
import jax.numpy as jnp
from jax.experimental import pallas as pl
from jax.experimental.pallas import tpu as pltpu


def _round_up(x, m):
    return ((x + m - 1) // m) * m


def _decoder_kernel(x_ref, w1_ref, b1_ref, w2_ref, b2_ref, w3_ref, b3_ref, o_ref):
    # Layer 1: (tm, K1) @ (K1, 128) + (1, 128), ReLU   (bf16 in, f32 acc)
    h1 = jnp.dot(x_ref[...], w1_ref[...], preferred_element_type=jnp.float32)
    h1 = jnp.maximum(h1 + b1_ref[...], 0.0).astype(jnp.bfloat16)
    # Layer 2: (tm, 128) @ (128, 256) + (1, 256), ReLU
    h2 = jnp.dot(h1, w2_ref[...], preferred_element_type=jnp.float32)
    h2 = jnp.maximum(h2 + b2_ref[...], 0.0).astype(jnp.bfloat16)
    # Layer 3: (tm, 256) @ (256, N3pad) + (1, N3pad)   (lane-dense output)
    out = jnp.dot(h2, w3_ref[...], preferred_element_type=jnp.float32)
    o_ref[...] = (out + b3_ref[...]).astype(o_ref.dtype)


@functools.partial(jax.jit, static_argnames=("block_m",))
def decoder_forward(x, params, block_m=512):
    """Fused MLP decoder forward pass.

    x: [batch, n_in] float32
    params: dict with w1 [n_in,128], b1 [1,128], w2 [128,256], b2 [1,256],
            w3 [256,n_out], b3 [1,n_out]   (all float32)
    returns: [batch, n_out] float32
    """
    w1, b1 = params["w1"], params["b1"]
    w2, b2 = params["w2"], params["b2"]
    w3, b3 = params["w3"], params["b3"]

    batch, n_in = x.shape
    h1_dim, h2_dim = w1.shape[1], w2.shape[1]
    n_out = w3.shape[1]

    # Lane-dense padding for the input-feature and output-feature axes.
    n_in_p = _round_up(max(n_in, 128), 128)
    n_out_p = _round_up(max(n_out, 128), 128)

    # Batch tiling: cap the tile at the (sublane-rounded) batch, then pad the
    # batch to a multiple of the tile so no divisibility constraint leaks out.
    bm = min(block_m, _round_up(batch, 8))
    bm = _round_up(bm, 8)
    batch_p = _round_up(batch, bm)

    # Wrapper-side zero-padding + bf16 cast of matmul operands.
    x_p = jnp.pad(x, ((0, batch_p - batch), (0, n_in_p - n_in))).astype(jnp.bfloat16)
    w1_p = jnp.pad(w1, ((0, n_in_p - n_in), (0, 0))).astype(jnp.bfloat16)
    w2_p = w2.astype(jnp.bfloat16)
    w3_p = jnp.pad(w3, ((0, 0), (0, n_out_p - n_out))).astype(jnp.bfloat16)
    b1_p = b1.astype(jnp.float32)
    b2_p = b2.astype(jnp.float32)
    b3_p = jnp.pad(b3, ((0, 0), (0, n_out_p - n_out))).astype(jnp.float32)

    grid = (batch_p // bm,)

    # Weights & biases: full-array blocks, same block for every grid step
    # (single DMA, VMEM-resident). Only x / out tiles pipeline per step.
    full = lambda arr: pl.BlockSpec(arr.shape, lambda i: (0, 0))

    out_p = pl.pallas_call(
        _decoder_kernel,
        out_shape=jax.ShapeDtypeStruct((batch_p, n_out_p), jnp.float32),
        grid_spec=pl.GridSpec(
            grid=grid,
            in_specs=[
                pl.BlockSpec((bm, n_in_p), lambda i: (i, 0)),  # x tile
                full(w1_p), full(b1_p),
                full(w2_p), full(b2_p),
                full(w3_p), full(b3_p),
            ],
            out_specs=pl.BlockSpec((bm, n_out_p), lambda i: (i, 0)),
        ),
        compiler_params=pltpu.CompilerParams(
            dimension_semantics=("parallel",),
            vmem_limit_bytes=64 * 1024 * 1024,
        ),
    )(x_p, w1_p, b1_p, w2_p, b2_p, w3_p, b3_p)

    return out_p[:batch, :n_out]


def init_decoder_params(key, n_in, n_out=2):
    """Deterministic init mimicking PyTorch nn.Linear (uniform +/- 1/sqrt(fan_in))."""
    dims = [(n_in, 128), (128, 256), (256, n_out)]
    params = {}
    for idx, (fan_in, fan_out) in enumerate(dims, start=1):
        key, kw, kb = jax.random.split(key, 3)
        bound = 1.0 / jnp.sqrt(jnp.float32(fan_in))
        params[f"w{idx}"] = jax.random.uniform(
            kw, (fan_in, fan_out), jnp.float32, -bound, bound
        )
        params[f"b{idx}"] = jax.random.uniform(
            kb, (1, fan_out), jnp.float32, -bound, bound
        )
    return params


def decoder_forward_ref(x, params):
    """Pure-JAX f32 reference for correctness check."""
    h = jnp.maximum(x @ params["w1"] + params["b1"], 0.0)
    h = jnp.maximum(h @ params["w2"] + params["b2"], 0.0)
    return h @ params["w3"] + params["b3"]


if __name__ == "__main__":
    key = jax.random.PRNGKey(0)
    n_in, n_out, batch = 32, 2, 16

    k_params, k_x = jax.random.split(key)
    params = init_decoder_params(k_params, n_in, n_out)
    x = jax.random.normal(k_x, (batch, n_in), jnp.float32)

    out = decoder_forward(x, params)  # block_m default 512, capped at batch
    out = jax.block_until_ready(out)

    ref = decoder_forward_ref(x, params)
    assert out.shape == (batch, n_out)
    # bf16 matmul inputs with f32 accumulation -> ~1% relative error vs f32 ref.
    assert jnp.allclose(out, ref, atol=2e-2, rtol=2e-2), "mismatch vs reference"

    print("KERNEL_OK")
</pallas_src>

<mosaic_0001>
module attributes {stable_mosaic.version = 11 : i64} {
  func.func @_decoder_kernel(%arg0: i32, %arg1: memref<16x128xbf16, #tpu.memory_space<vmem>>, %arg2: memref<128x128xbf16, #tpu.memory_space<vmem>>, %arg3: memref<1x128xf32, #tpu.memory_space<vmem>>, %arg4: memref<128x256xbf16, #tpu.memory_space<vmem>>, %arg5: memref<1x256xf32, #tpu.memory_space<vmem>>, %arg6: memref<256x128xbf16, #tpu.memory_space<vmem>>, %arg7: memref<1x128xf32, #tpu.memory_space<vmem>>, %arg8: memref<16x128xf32, #tpu.memory_space<vmem>>) attributes {dimension_semantics = [#tpu.dimension_semantics<parallel>], iteration_bounds = array<i64: 1>, scalar_prefetch = 0 : i64, scratch_operands = 0 : i64, tpu.core_type = #tpu.core_type<tc>, window_params = [{transform_indices = @transform_0, window_bounds = array<i64: 16, 128>}, {pipeline_mode = #tpu.pipeline_mode<synchronous>, transform_indices = @transform_1, window_bounds = array<i64: 128, 128>}, {pipeline_mode = #tpu.pipeline_mode<synchronous>, transform_indices = @transform_2, window_bounds = array<i64: 1, 128>}, {pipeline_mode = #tpu.pipeline_mode<synchronous>, transform_indices = @transform_3, window_bounds = array<i64: 128, 256>}, {pipeline_mode = #tpu.pipeline_mode<synchronous>, transform_indices = @transform_4, window_bounds = array<i64: 1, 256>}, {pipeline_mode = #tpu.pipeline_mode<synchronous>, transform_indices = @transform_5, window_bounds = array<i64: 256, 128>}, {pipeline_mode = #tpu.pipeline_mode<synchronous>, transform_indices = @transform_6, window_bounds = array<i64: 1, 128>}, {transform_indices = @transform_7, window_bounds = array<i64: 16, 128>}]} {
    %c0 = arith.constant 0 : index
    %c0_0 = arith.constant 0 : index
    %0 = vector.load %arg1[%c0, %c0_0] : memref<16x128xbf16, #tpu.memory_space<vmem>>, vector<16x128xbf16>
    %c0_1 = arith.constant 0 : index
    %c0_2 = arith.constant 0 : index
    %1 = vector.load %arg2[%c0_1, %c0_2] : memref<128x128xbf16, #tpu.memory_space<vmem>>, vector<128x128xbf16>
    %cst = arith.constant dense<0.000000e+00> : vector<16x128xf32>
    %2 = tpu.matmul %0, %1, %cst {dimension_numbers = #tpu.dot_dimension_numbers<[1], [0], [0], [1], [0, 0, 1, 1], [], []>} : vector<16x128xbf16>, vector<128x128xbf16>, vector<16x128xf32> -> vector<16x128xf32>
    %c0_3 = arith.constant 0 : index
    %c0_4 = arith.constant 0 : index
    %3 = vector.load %arg3[%c0_3, %c0_4] : memref<1x128xf32, #tpu.memory_space<vmem>>, vector<1x128xf32>
    %4 = vector.broadcast %3 : vector<1x128xf32> to vector<16x128xf32>
    %5 = arith.addf %2, %4 : vector<16x128xf32>
    %cst_5 = arith.constant 0.000000e+00 : f32
    %6 = vector.broadcast %cst_5 : f32 to vector<16x128xf32>
    %7 = arith.maximumf %5, %6 : vector<16x128xf32>
    %8 = arith.truncf %7 : vector<16x128xf32> to vector<16x128xbf16>
    %c0_6 = arith.constant 0 : index
    %c0_7 = arith.constant 0 : index
    %9 = vector.load %arg4[%c0_6, %c0_7] : memref<128x256xbf16, #tpu.memory_space<vmem>>, vector<128x256xbf16>
    %cst_8 = arith.constant dense<0.000000e+00> : vector<16x256xf32>
    %10 = tpu.matmul %8, %9, %cst_8 {dimension_numbers = #tpu.dot_dimension_numbers<[1], [0], [0], [1], [0, 0, 1, 1], [], []>} : vector<16x128xbf16>, vector<128x256xbf16>, vector<16x256xf32> -> vector<16x256xf32>
    %c0_9 = arith.constant 0 : index
    %c0_10 = arith.constant 0 : index
    %11 = vector.load %arg5[%c0_9, %c0_10] : memref<1x256xf32, #tpu.memory_space<vmem>>, vector<1x256xf32>
    %12 = vector.broadcast %11 : vector<1x256xf32> to vector<16x256xf32>
    %13 = arith.addf %10, %12 : vector<16x256xf32>
    %cst_11 = arith.constant 0.000000e+00 : f32
    %14 = vector.broadcast %cst_11 : f32 to vector<16x256xf32>
    %15 = arith.maximumf %13, %14 : vector<16x256xf32>
    %16 = arith.truncf %15 : vector<16x256xf32> to vector<16x256xbf16>
    %c0_12 = arith.constant 0 : index
    %c0_13 = arith.constant 0 : index
    %17 = vector.load %arg6[%c0_12, %c0_13] : memref<256x128xbf16, #tpu.memory_space<vmem>>, vector<256x128xbf16>
    %cst_14 = arith.constant dense<0.000000e+00> : vector<16x128xf32>
    %18 = tpu.matmul %16, %17, %cst_14 {dimension_numbers = #tpu.dot_dimension_numbers<[1], [0], [0], [1], [0, 0, 1, 1], [], []>} : vector<16x256xbf16>, vector<256x128xbf16>, vector<16x128xf32> -> vector<16x128xf32>
    %c0_15 = arith.constant 0 : index
    %c0_16 = arith.constant 0 : index
    %19 = vector.load %arg7[%c0_15, %c0_16] : memref<1x128xf32, #tpu.memory_space<vmem>>, vector<1x128xf32>
    %20 = vector.broadcast %19 : vector<1x128xf32> to vector<16x128xf32>
    %21 = arith.addf %18, %20 : vector<16x128xf32>
    %c0_17 = arith.constant 0 : index
    %c0_18 = arith.constant 0 : index
    %22 = vector.load %arg8[%c0_17, %c0_18] : memref<16x128xf32, #tpu.memory_space<vmem>>, vector<16x128xf32>
    tpu.vector_store %arg8[%c0_17, %c0_18], %21 {strides = array<i32>} : memref<16x128xf32, #tpu.memory_space<vmem>>, vector<16x128xf32>,
    return
  }
  func.func @transform_0(%arg0: i32) -> (i32, i32) {
    %c0_i32 = arith.constant 0 : i32
    %c0_i32_0 = arith.constant 0 : i32
    return %arg0, %c0_i32 : i32, i32
  }
  func.func @transform_1(%arg0: i32) -> (i32, i32) {
    %c0_i32 = arith.constant 0 : i32
    %c0_i32_0 = arith.constant 0 : i32
    %c0_i32_1 = arith.constant 0 : i32
    return %c0_i32, %c0_i32_0 : i32, i32
  }
  func.func @transform_2(%arg0: i32) -> (i32, i32) {
    %c0_i32 = arith.constant 0 : i32
    %c0_i32_0 = arith.constant 0 : i32
    %c0_i32_1 = arith.constant 0 : i32
    return %c0_i32, %c0_i32_0 : i32, i32
  }
  func.func @transform_3(%arg0: i32) -> (i32, i32) {
    %c0_i32 = arith.constant 0 : i32
    %c0_i32_0 = arith.constant 0 : i32
    %c0_i32_1 = arith.constant 0 : i32
    return %c0_i32, %c0_i32_0 : i32, i32
  }
  func.func @transform_4(%arg0: i32) -> (i32, i32) {
    %c0_i32 = arith.constant 0 : i32
    %c0_i32_0 = arith.constant 0 : i32
    %c0_i32_1 = arith.constant 0 : i32
    return %c0_i32, %c0_i32_0 : i32, i32
  }
  func.func @transform_5(%arg0: i32) -> (i32, i32) {
    %c0_i32 = arith.constant 0 : i32
    %c0_i32_0 = arith.constant 0 : i32
    %c0_i32_1 = arith.constant 0 : i32
    return %c0_i32, %c0_i32_0 : i32, i32
  }
  func.func @transform_6(%arg0: i32) -> (i32, i32) {
    %c0_i32 = arith.constant 0 : i32
    %c0_i32_0 = arith.constant 0 : i32
    %c0_i32_1 = arith.constant 0 : i32
    return %c0_i32, %c0_i32_0 : i32, i32
  }
  func.func @transform_7(%arg0: i32) -> (i32, i32) {
    %c0_i32 = arith.constant 0 : i32
    %c0_i32_0 = arith.constant 0 : i32
    return %arg0, %c0_i32 : i32, i32
  }
}

</mosaic_0001>

<llo_original>
// kernel: decoder_forward.1
$region0: #{decoder_forward.1}
  #allocation0 [shape = 'u32[]', space=smem, size = 0x4, offset = 0x4, fixed_abs, tag = 'smem constant byte address 0x4 - core index']
  #allocation1 [shape = 'u32[144,128]{1,0:T(1,128)}', space=vmem, size = 0x12000, scoped, tag = 'internal scratch']
  %s0 = inlined_call_operand.vmem [shape: bf16[16,128], index: 0, kind: input, shape index: {}]
  %s1 = inlined_call_operand.vmem [shape: bf16[128,128], index: 1, kind: input, shape index: {}]
  %s2 = inlined_call_operand.vmem [shape: f32[1,128], index: 2, kind: input, shape index: {}]
  %s3 = inlined_call_operand.vmem [shape: bf16[128,256], index: 3, kind: input, shape index: {}]
  %s4 = inlined_call_operand.vmem [shape: f32[1,256], index: 4, kind: input, shape index: {}]
  %s5 = inlined_call_operand.vmem [shape: bf16[256,128], index: 5, kind: input, shape index: {}]
  %s6 = inlined_call_operand.vmem [shape: f32[1,128], index: 6, kind: input, shape index: {}]
  %s7 = inlined_call_operand.vmem [shape: f32[16,128], index: 7, kind: output, shape index: {}]
  %s8 = sld [smem:[#allocation0]]
  $region38: #{decoder_forward.1} parent=0
    _
  %s10 = ssub.s32 1, %s8
  %s11 = scalar_select 0, %s10, %s8
  // Predicated region
  $region2: #{decoder_forward.1} parent=0 // pred_check
    _
  $region3: #{decoder_forward.1} parent=0 // pred_check_branch
    %13 = sbr.rel (0) target = $region5
  $region4: #{decoder_forward.1} parent=0 // pred_region
    _
  $region5: #{decoder_forward.1} parent=0 // pred_fallthru
    _
  // Predicated region
  $region6: #{decoder_forward.1} parent=0 // pred_check
    _
  $region7: #{decoder_forward.1} parent=0 // pred_check_branch
    %15 = sbr.rel (0) target = $region9
  $region8: #{decoder_forward.1} parent=0 // pred_region
    _
  $region9: #{decoder_forward.1} parent=0 // pred_fallthru
    _
  // Predicated region
  $region10: #{decoder_forward.1} parent=0 // pred_check
    _
  $region11: #{decoder_forward.1} parent=0 // pred_check_branch
    %17 = sbr.rel (0) target = $region13
  $region12: #{decoder_forward.1} parent=0 // pred_region
    _
  $region13: #{decoder_forward.1} parent=0 // pred_fallthru
    _
  // Predicated region
  $region14: #{decoder_forward.1} parent=0 // pred_check
    _
  $region15: #{decoder_forward.1} parent=0 // pred_check_branch
    %19 = sbr.rel (0) target = $region17
  $region16: #{decoder_forward.1} parent=0 // pred_region
    _
  $region17: #{decoder_forward.1} parent=0 // pred_fallthru
    _
  // Predicated region
  $region18: #{decoder_forward.1} parent=0 // pred_check
    _
  $region19: #{decoder_forward.1} parent=0 // pred_check_branch
    %21 = sbr.rel (0) target = $region21
  $region20: #{decoder_forward.1} parent=0 // pred_region
    _
  $region21: #{decoder_forward.1} parent=0 // pred_fallthru
    _
  // Predicated region
  $region22: #{decoder_forward.1} parent=0 // pred_check
    _
  $region23: #{decoder_forward.1} parent=0 // pred_check_branch
    %23 = sbr.rel (0) target = $region25
  $region24: #{decoder_forward.1} parent=0 // pred_region
    _
  $region25: #{decoder_forward.1} parent=0 // pred_fallthru
    _
  // Predicated region
  $region26: #{decoder_forward.1} parent=0 // pred_check
    _
  $region27: #{decoder_forward.1} parent=0 // pred_check_branch
    %25 = sbr.rel (0) target = $region29
  $region28: #{decoder_forward.1} parent=0 // pred_region
    _
  $region29: #{decoder_forward.1} parent=0 // pred_fallthru
    _
  %v27 = vld [vmem:[%s0] sm:$0xf]
  %v28 = vld [vmem:[%s0 + $0x4] sm:$0xf]
  %v29 = vld [vmem:[%s1] sm:$0xf]
  %v30 = vld [vmem:[%s1 + $0x4] sm:$0xf]
  %v31 = vld [vmem:[%s1 + $0x8] sm:$0xf]
  %v32 = vld [vmem:[%s1 + $0xc] sm:$0xf]
  %v33 = vld [vmem:[%s1 + $0x10] sm:$0xf]
  %v34 = vld [vmem:[%s1 + $0x14] sm:$0xf]
  %v35 = vld [vmem:[%s1 + $0x18] sm:$0xf]
  %v36 = vld [vmem:[%s1 + $0x1c] sm:$0xf]
  %v37 = vld [vmem:[%s1 + $0x20] sm:$0xf]
  %v38 = vld [vmem:[%s1 + $0x24] sm:$0xf]
  %v39 = vld [vmem:[%s1 + $0x28] sm:$0xf]
  %v40 = vld [vmem:[%s1 + $0x2c] sm:$0xf]
  %v41 = vld [vmem:[%s1 + $0x30] sm:$0xf]
  %v42 = vld [vmem:[%s1 + $0x34] sm:$0xf]
  %v43 = vld [vmem:[%s1 + $0x38] sm:$0xf]
  %v44 = vld [vmem:[%s1 + $0x3c] sm:$0xf]
  %v45 = vld [vmem:[%s2] sm:$0x1]
  %v47 = vlaneseq
  %v48 = vshrl.u32 %v47, 7
  %v49 = vsub.s32 0, %v48
  %v50 = vrot.slane %v45, %v49
  %v54 = vunpack.c.l.b16 %v27
  %v55 = vunpack.c.l.b16 %v28
  %v56 = vpack.c.b16 %v55, %v54
  %v74 = vunpack.c.l.b16 %v29
  %v75 = vunpack.c.l.b16 %v30
  %v76 = vunpack.c.l.b16 %v31
  %v77 = vunpack.c.l.b16 %v32
  %v78 = vunpack.c.l.b16 %v33
  %v79 = vunpack.c.l.b16 %v34
  %v80 = vunpack.c.l.b16 %v35
  %v81 = vunpack.c.l.b16 %v36
  %v82 = vunpack.c.l.b16 %v37
  %v83 = vunpack.c.l.b16 %v38
  %v84 = vunpack.c.l.b16 %v39
  %v85 = vunpack.c.l.b16 %v40
  %v86 = vunpack.c.l.b16 %v41
  %v87 = vunpack.c.l.b16 %v42
  %v88 = vunpack.c.l.b16 %v43
  %v89 = vunpack.c.l.b16 %v44
  %v90 = vpack.c.b16 %v75, %v74
  %v91 = vpack.c.b16 %v77, %v76
  %v92 = vpack.c.b16 %v79, %v78
  %v93 = vpack.c.b16 %v81, %v80
  %v94 = vpack.c.b16 %v83, %v82
  %v95 = vpack.c.b16 %v85, %v84
  %v96 = vpack.c.b16 %v87, %v86
  %v97 = vpack.c.b16 %v89, %v88
  %106 = vmatprep.subr.bf16.mxu0 0
  %107 = vmatpush1.bf16.msra.mxu0 %v97
  %108 = vmatprep.subr.bf16.mxu0 0
  %109 = vmatpush1.bf16.msra.mxu0 %v96
  %110 = vmatprep.subr.bf16.mxu0 0
  %111 = vmatpush1.bf16.msra.mxu0 %v95
  %112 = vmatprep.subr.bf16.mxu0 0
  %113 = vmatpush1.bf16.msra.mxu0 %v94
  %114 = vmatprep.subr.bf16.mxu0 0
  %115 = vmatpush1.bf16.msra.mxu0 %v93
  %116 = vmatprep.subr.bf16.mxu0 0
  %117 = vmatpush1.bf16.msra.mxu0 %v92
  %118 = vmatprep.subr.bf16.mxu0 0
  %119 = vmatpush1.bf16.msra.mxu0 %v91
  %120 = vmatprep.subr.bf16.mxu0 0
  %121 = vmatpush1.bf16.msra.mxu0 %v90
  %122 = vmatprep.subr.bf16.mxu0 0
  %123 = vmatpush2.bf16.msra.mxu0 0
  %124 = vmatprep.subr.bf16.mxu0 0
  %125 = vmatpush2.bf16.msra.mxu0 0
  %126 = vmatprep.subr.bf16.mxu0 0
  %127 = vmatpush2.bf16.msra.mxu0 0
  %128 = vmatprep.subr.bf16.mxu0 0
  %129 = vmatpush2.bf16.msra.mxu0 0
  %130 = vmatprep.subr.bf16.mxu0 0
  %131 = vmatpush2.bf16.msra.mxu0 0
  %132 = vmatprep.subr.bf16.mxu0 0
  %133 = vmatpush2.bf16.msra.mxu0 0
  %134 = vmatprep.subr.bf16.mxu0 0
  %135 = vmatpush2.bf16.msra.mxu0 0
  %136 = vmatprep.subr.bf16.mxu0 0
  %137 = vmatpush2.bf16.msra.mxu0 0
  %138 = vmatprep.mubr.bf16.mxu0 0
  %139 = vmatmul.mubr.bf16.gmra.mxu0 %v56
  %v140 = vpop.f32.mrf.mxu0
  %v141 = vadd.f32 %v50, %v140
  %v142 = vpop.f32.mrf.mxu0
  %v143 = vpop.f32.mrf.mxu0
  %v144 = vadd.f32 %v50, %v143
  %v145 = vpop.f32.mrf.mxu0
  %146 = vdwg.mxu0
  %v147 = vmax.f32 %v141, 0.0
  %v148 = vmax.f32 %v144, 0.0
  %v149 = vpack.c.bf16 %v148, %v147
  %v150 = vld [vmem:[%s3] sm:$0xff]
  %v151 = vld [vmem:[%s3 + $0x8] sm:$0xff]
  %v152 = vld [vmem:[%s3 + $0x10] sm:$0xff]
  %v153 = vld [vmem:[%s3 + $0x18] sm:$0xff]
  %v154 = vld [vmem:[%s3 + $0x20] sm:$0xff]
  %v155 = vld [vmem:[%s3 + $0x28] sm:$0xff]
  %v156 = vld [vmem:[%s3 + $0x30] sm:$0xff]
  %v157 = vld [vmem:[%s3 + $0x38] sm:$0xff]
  %v158 = vld [vmem:[%s3 + $0x40] sm:$0xff]
  %v159 = vld [vmem:[%s3 + $0x48] sm:$0xff]
  %v160 = vld [vmem:[%s3 + $0x50] sm:$0xff]
  %v161 = vld [vmem:[%s3 + $0x58] sm:$0xff]
  %v162 = vld [vmem:[%s3 + $0x60] sm:$0xff]
  %v163 = vld [vmem:[%s3 + $0x68] sm:$0xff]
  %v164 = vld [vmem:[%s3 + $0x70] sm:$0xff]
  %v165 = vld [vmem:[%s3 + $0x78] sm:$0xff]
  %v166 = vld [vmem:[%s4] sm:$0x3]
  %v168 = vlaneseq
  %v169 = vshrl.u32 %v168, 7
  %v170 = vsub.s32 0, %v169
  %v171 = vrot.slane %v166, %v170
  %v172 = vlaneseq
  %v173 = vshrl.u32 %v172, 7
  %v174 = vsub.s32 1, %v173
  %v175 = vrot.slane %v166, %v174
  %v194 = vunpack.c.l.b16 %v150
  %v195 = vunpack.c.h.b16 %v150
  %v196 = vunpack.c.l.b16 %v151
  %v197 = vunpack.c.h.b16 %v151
  %v198 = vunpack.c.l.b16 %v152
  %v199 = vunpack.c.h.b16 %v152
  %v200 = vunpack.c.l.b16 %v153
  %v201 = vunpack.c.h.b16 %v153
  %v202 = vunpack.c.l.b16 %v154
  %v203 = vunpack.c.h.b16 %v154
  %v204 = vunpack.c.l.b16 %v155
  %v205 = vunpack.c.h.b16 %v155
  %v206 = vunpack.c.l.b16 %v156
  %v207 = vunpack.c.h.b16 %v156
  %v208 = vunpack.c.l.b16 %v157
  %v209 = vunpack.c.h.b16 %v157
  %v210 = vunpack.c.l.b16 %v158
  %v211 = vunpack.c.h.b16 %v158
  %v212 = vunpack.c.l.b16 %v159
  %v213 = vunpack.c.h.b16 %v159
  %v214 = vunpack.c.l.b16 %v160
  %v215 = vunpack.c.h.b16 %v160
  %v216 = vunpack.c.l.b16 %v161
  %v217 = vunpack.c.h.b16 %v161
  %v218 = vunpack.c.l.b16 %v162
  %v219 = vunpack.c.h.b16 %v162
  %v220 = vunpack.c.l.b16 %v163
  %v221 = vunpack.c.h.b16 %v163
  %v222 = vunpack.c.l.b16 %v164
  %v223 = vunpack.c.h.b16 %v164
  %v224 = vunpack.c.l.b16 %v165
  %v225 = vunpack.c.h.b16 %v165
  %v226 = vpack.c.b16 %v196, %v194
  %v227 = vpack.c.b16 %v197, %v195
  %v228 = vpack.c.b16 %v200, %v198
  %v229 = vpack.c.b16 %v201, %v199
  %v230 = vpack.c.b16 %v204, %v202
  %v231 = vpack.c.b16 %v205, %v203
  %v232 = vpack.c.b16 %v208, %v206
  %v233 = vpack.c.b16 %v209, %v207
  %v234 = vpack.c.b16 %v212, %v210
  %v235 = vpack.c.b16 %v213, %v211
  %v236 = vpack.c.b16 %v216, %v214
  %v237 = vpack.c.b16 %v217, %v215
  %v238 = vpack.c.b16 %v220, %v218
  %v239 = vpack.c.b16 %v221, %v219
  %v240 = vpack.c.b16 %v224, %v222
  %v241 = vpack.c.b16 %v225, %v223
  %258 = vmatprep.subr.bf16.mxu0 %v241
  %259 = vmatpush1.bf16.msra.mxu0 %v240
  %260 = vmatprep.subr.bf16.mxu0 %v239
  %261 = vmatpush1.bf16.msra.mxu0 %v238
  %262 = vmatprep.subr.bf16.mxu0 %v237
  %263 = vmatpush1.bf16.msra.mxu0 %v236
  %264 = vmatprep.subr.bf16.mxu0 %v235
  %265 = vmatpush1.bf16.msra.mxu0 %v234
  %266 = vmatprep.subr.bf16.mxu0 %v233
  %267 = vmatpush1.bf16.msra.mxu0 %v232
  %268 = vmatprep.subr.bf16.mxu0 %v231
  %269 = vmatpush1.bf16.msra.mxu0 %v230
  %270 = vmatprep.subr.bf16.mxu0 %v229
  %271 = vmatpush1.bf16.msra.mxu0 %v228
  %272 = vmatprep.subr.bf16.mxu0 %v227
  %273 = vmatpush1.bf16.msra.mxu0 %v226
  %274 = vmatprep.subr.bf16.mxu0 0
  %275 = vmatpush2.bf16.msra.mxu0 0
  %276 = vmatprep.subr.bf16.mxu0 0
  %277 = vmatpush2.bf16.msra.mxu0 0
  %278 = vmatprep.subr.bf16.mxu0 0
  %279 = vmatpush2.bf16.msra.mxu0 0
  %280 = vmatprep.subr.bf16.mxu0 0
  %281 = vmatpush2.bf16.msra.mxu0 0
  %282 = vmatprep.subr.bf16.mxu0 0
  %283 = vmatpush2.bf16.msra.mxu0 0
  %284 = vmatprep.subr.bf16.mxu0 0
  %285 = vmatpush2.bf16.msra.mxu0 0
  %286 = vmatprep.subr.bf16.mxu0 0
  %287 = vmatpush2.bf16.msra.mxu0 0
  %288 = vmatprep.subr.bf16.mxu0 0
  %289 = vmatpush2.bf16.msra.mxu0 0
  %290 = vmatprep.mubr.bf16.mxu0 0
  %291 = vmatmul.mubr.bf16.gmra.mxu0 %v149
  %v292 = vpop.f32.mrf.mxu0
  %v293 = vadd.f32 %v171, %v292
  %v294 = vpop.f32.mrf.mxu0
  %v295 = vadd.f32 %v175, %v294
  %v296 = vpop.f32.mrf.mxu0
  %v297 = vadd.f32 %v171, %v296
  %v298 = vpop.f32.mrf.mxu0
  %v299 = vadd.f32 %v175, %v298
  %300 = vdwg.mxu0
  %v301 = vmax.f32 %v293, 0.0
  %v302 = vmax.f32 %v295, 0.0
  %v303 = vmax.f32 %v297, 0.0
  %v304 = vmax.f32 %v299, 0.0
  %v305 = vpack.c.bf16 %v303, %v301
  %v306 = vpack.c.bf16 %v304, %v302
  %v307 = vld [vmem:[%s5] sm:$0xf]
  %v308 = vld [vmem:[%s5 + $0x4] sm:$0xf]
  %v309 = vld [vmem:[%s5 + $0x8] sm:$0xf]
  %v310 = vld [vmem:[%s5 + $0xc] sm:$0xf]
  %v311 = vld [vmem:[%s5 + $0x10] sm:$0xf]
  %v312 = vld [vmem:[%s5 + $0x14] sm:$0xf]
  %v313 = vld [vmem:[%s5 + $0x18] sm:$0xf]
  %v314 = vld [vmem:[%s5 + $0x1c] sm:$0xf]
  %v315 = vld [vmem:[%s5 + $0x20] sm:$0xf]
  %v316 = vld [vmem:[%s5 + $0x24] sm:$0xf]
  %v317 = vld [vmem:[%s5 + $0x28] sm:$0xf]
  %v318 = vld [vmem:[%s5 + $0x2c] sm:$0xf]
  %v319 = vld [vmem:[%s5 + $0x30] sm:$0xf]
  %v320 = vld [vmem:[%s5 + $0x34] sm:$0xf]
  %v321 = vld [vmem:[%s5 + $0x38] sm:$0xf]
  %v322 = vld [vmem:[%s5 + $0x3c] sm:$0xf]
  %v323 = vld [vmem:[%s5 + $0x40] sm:$0xf]
  %v324 = vld [vmem:[%s5 + $0x44] sm:$0xf]
  %v325 = vld [vmem:[%s5 + $0x48] sm:$0xf]
  %v326 = vld [vmem:[%s5 + $0x4c] sm:$0xf]
  %v327 = vld [vmem:[%s5 + $0x50] sm:$0xf]
  %v328 = vld [vmem:[%s5 + $0x54] sm:$0xf]
  %v329 = vld [vmem:[%s5 + $0x58] sm:$0xf]
  %v330 = vld [vmem:[%s5 + $0x5c] sm:$0xf]
  %v331 = vld [vmem:[%s5 + $0x60] sm:$0xf]
  %v332 = vld [vmem:[%s5 + $0x64] sm:$0xf]
  %v333 = vld [vmem:[%s5 + $0x68] sm:$0xf]
  %v334 = vld [vmem:[%s5 + $0x6c] sm:$0xf]
  %v335 = vld [vmem:[%s5 + $0x70] sm:$0xf]
  %v336 = vld [vmem:[%s5 + $0x74] sm:$0xf]
  %v337 = vld [vmem:[%s5 + $0x78] sm:$0xf]
  %v338 = vld [vmem:[%s5 + $0x7c] sm:$0xf]
  %v339 = vld [vmem:[%s6] sm:$0x1]
  %v341 = vlaneseq
  %v342 = vshrl.u32 %v341, 7
  %v343 = vsub.s32 0, %v342
  %v344 = vrot.slane %v339, %v343
  %v378 = vunpack.c.l.b16 %v307
  %v379 = vunpack.c.l.b16 %v308
  %v380 = vunpack.c.l.b16 %v309
  %v381 = vunpack.c.l.b16 %v310
  %v382 = vunpack.c.l.b16 %v311
  %v383 = vunpack.c.l.b16 %v312
  %v384 = vunpack.c.l.b16 %v313
  %v385 = vunpack.c.l.b16 %v314
  %v386 = vunpack.c.l.b16 %v315
  %v387 = vunpack.c.l.b16 %v316
  %v388 = vunpack.c.l.b16 %v317
  %v389 = vunpack.c.l.b16 %v318
  %v390 = vunpack.c.l.b16 %v319
  %v391 = vunpack.c.l.b16 %v320
  %v392 = vunpack.c.l.b16 %v321
  %v393 = vunpack.c.l.b16 %v322
  %v394 = vunpack.c.l.b16 %v323
  %v395 = vunpack.c.l.b16 %v324
  %v396 = vunpack.c.l.b16 %v325
  %v397 = vunpack.c.l.b16 %v326
  %v398 = vunpack.c.l.b16 %v327
  %v399 = vunpack.c.l.b16 %v328
  %v400 = vunpack.c.l.b16 %v329
  %v401 = vunpack.c.l.b16 %v330
  %v402 = vunpack.c.l.b16 %v331
  %v403 = vunpack.c.l.b16 %v332
  %v404 = vunpack.c.l.b16 %v333
  %v405 = vunpack.c.l.b16 %v334
  %v406 = vunpack.c.l.b16 %v335
  %v407 = vunpack.c.l.b16 %v336
  %v408 = vunpack.c.l.b16 %v337
  %v409 = vunpack.c.l.b16 %v338
  %v410 = vpack.c.b16 %v379, %v378
  %v411 = vpack.c.b16 %v381, %v380
  %v412 = vpack.c.b16 %v383, %v382
  %v413 = vpack.c.b16 %v385, %v384
  %v414 = vpack.c.b16 %v387, %v386
  %v415 = vpack.c.b16 %v389, %v388
  %v416 = vpack.c.b16 %v391, %v390
  %v417 = vpack.c.b16 %v393, %v392
  %v418 = vpack.c.b16 %v395, %v394
  %v419 = vpack.c.b16 %v397, %v396
  %v420 = vpack.c.b16 %v399, %v398
  %v421 = vpack.c.b16 %v401, %v400
  %v422 = vpack.c.b16 %v403, %v402
  %v423 = vpack.c.b16 %v405, %v404
  %v424 = vpack.c.b16 %v407, %v406
  %v425 = vpack.c.b16 %v409, %v408
  %442 = vmatprep.subr.bf16.mxu0 0
  %443 = vmatpush1.bf16.msra.mxu0 %v417
  %444 = vmatprep.subr.bf16.mxu0 0
  %445 = vmatpush1.bf16.msra.mxu0 %v416
  %446 = vmatprep.subr.bf16.mxu0 0
  %447 = vmatpush1.bf16.msra.mxu0 %v415
  %448 = vmatprep.subr.bf16.mxu0 0
  %449 = vmatpush1.bf16.msra.mxu0 %v414
  %450 = vmatprep.subr.bf16.mxu0 0
  %451 = vmatpush1.bf16.msra.mxu0 %v413
  %452 = vmatprep.subr.bf16.mxu0 0
  %453 = vmatpush1.bf16.msra.mxu0 %v412
  %454 = vmatprep.subr.bf16.mxu0 0
  %455 = vmatpush1.bf16.msra.mxu0 %v411
  %456 = vmatprep.subr.bf16.mxu0 0
  %457 = vmatpush1.bf16.msra.mxu0 %v410
  %458 = vmatprep.subr.bf16.mxu0 0
  %459 = vmatpush2.bf16.msra.mxu0 %v425
  %460 = vmatprep.subr.bf16.mxu0 0
  %461 = vmatpush2.bf16.msra.mxu0 %v424
  %462 = vmatprep.subr.bf16.mxu0 0
  %463 = vmatpush2.bf16.msra.mxu0 %v423
  %464 = vmatprep.subr.bf16.mxu0 0
  %465 = vmatpush2.bf16.msra.mxu0 %v422
  %466 = vmatprep.subr.bf16.mxu0 0
  %467 = vmatpush2.bf16.msra.mxu0 %v421
  %468 = vmatprep.subr.bf16.mxu0 0
  %469 = vmatpush2.bf16.msra.mxu0 %v420
  %470 = vmatprep.subr.bf16.mxu0 0
  %471 = vmatpush2.bf16.msra.mxu0 %v419
  %472 = vmatprep.subr.bf16.mxu0 0
  %473 = vmatpush2.bf16.msra.mxu0 %v418
  %474 = vmatprep.mubr.bf16.mxu0 %v306
  %475 = vmatmul.mubr.bf16.gmra.mxu0 %v305
  %v476 = vpop.f32.mrf.mxu0
  %v477 = vadd.f32 %v344, %v476
  %v478 = vpop.f32.mrf.mxu0
  %v479 = vpop.f32.mrf.mxu0
  %v480 = vadd.f32 %v344, %v479
  %v481 = vpop.f32.mrf.mxu0
  %482 = vdwg.mxu0
  %483 = vst [vmem:[%s7] sm:$0xff] %v477
  %484 = vst [vmem:[%s7 + $0x8] sm:$0xff] %v480
  // Predicated region
  $region30: #{decoder_forward.1} parent=0 // pred_check
    _
  $region31: #{decoder_forward.1} parent=0 // pred_check_branch
    %486 = sbr.rel (0) target = $region33
  $region32: #{decoder_forward.1} parent=0 // pred_region
    _
  $region33: #{decoder_forward.1} parent=0 // pred_fallthru
    _
  // Predicated region
  $region34: #{decoder_forward.1} parent=0 // pred_check
    _
  $region35: #{decoder_forward.1} parent=0 // pred_check_branch
    %488 = sbr.rel (0) target = $region37
  $region36: #{decoder_forward.1} parent=0 // pred_region
    _
  $region37: #{decoder_forward.1} parent=0 // pred_fallthru
    _

</llo_original>
